<compile_context>
chip_gen: v5e
topology: v5e:2x2
jax: 0.10.0
libtpu: 0.0.40
codegen_flags: <defaults>
</compile_context>

<pallas_src>
import functools

import jax
import jax.numpy as jnp
from jax import lax
from jax.experimental import pallas as pl
from jax.experimental.pallas import tpu as pltpu

# [M, K] x [N, K] -> [M, N]   (contract on last axis of both operands)
_CONTRACT_ON_LAST = (((1,), (1,)), ((), ()))


def _relu(x):
    return jnp.maximum(x, jnp.zeros((), x.dtype))


def _round_up(v, m):
    return ((v + m - 1) // m) * m


# ----------------------------------------------------------------------------
# Kernels
# ----------------------------------------------------------------------------
def _single_block_kernel(x_ref, w_ref, o_ref, *, compute_dtype):
    """Fast path: full problem in one block. relu (VPU) + matmul (MXU)."""
    y = _relu(x_ref[...])
    w = w_ref[...]
    if compute_dtype is not None:
        y = y.astype(compute_dtype)
        w = w.astype(compute_dtype)
    o_ref[...] = lax.dot_general(
        y, w,
        dimension_numbers=_CONTRACT_ON_LAST,
        preferred_element_type=jnp.float32,
    ).astype(o_ref.dtype)


def _tiled_kernel(x_ref, w_ref, o_ref, acc_ref, *, compute_dtype):
    """Tiled path: K is grid axis 2 (innermost); acc_ref resident across K."""

    @pl.when(pl.program_id(2) == 0)
    def _init():
        acc_ref[...] = jnp.zeros_like(acc_ref)

    y = _relu(x_ref[...])          # elementwise, fused ahead of the MXU op
    w = w_ref[...]
    if compute_dtype is not None:
        y = y.astype(compute_dtype)
        w = w.astype(compute_dtype)
    acc_ref[...] += lax.dot_general(
        y, w,
        dimension_numbers=_CONTRACT_ON_LAST,
        preferred_element_type=jnp.float32,
    )

    @pl.when(pl.program_id(2) == pl.num_programs(2) - 1)
    def _finalize():
        o_ref[...] = acc_ref[...].astype(o_ref.dtype)


# ----------------------------------------------------------------------------
# Wrapper
# ----------------------------------------------------------------------------
def linear_forward(x, weight, *, tm=256, tn=256, tk=512,
                   matmul_dtype=None, vmem_limit_bytes=32 * 1024 * 1024):
    """Forward of Linear (default config): relu(x) @ weight.T.

    x:      (..., n_in)    activations (leading dims flattened like nn.Linear).
    weight: (n_out, n_in)  PyTorch nn.Linear layout, consumed as-is.
    matmul_dtype: e.g. jnp.bfloat16 to run the MXU in bf16 (f32 accumulation).
    """
    orig_shape = x.shape
    if x.ndim != 2:
        x = x.reshape(-1, orig_shape[-1])
    M, K = x.shape
    N, Kw = weight.shape
    assert K == Kw, "weight must be (n_out, n_in)"
    out_dtype = x.dtype

    if matmul_dtype is not None and weight.dtype != matmul_dtype:
        # NOTE: for a stationary weight, cast once at parameter-init time
        # (store bf16 weights); this per-call cast is demo convenience.
        weight = weight.astype(matmul_dtype)

    # ---------------- fast path: everything fits one block -----------------
    if M <= tm and N <= tn and K <= tk:
        out = pl.pallas_call(
            functools.partial(_single_block_kernel, compute_dtype=matmul_dtype),
            out_shape=jax.ShapeDtypeStruct((M, N), out_dtype),
            grid=(1,),
            in_specs=[
                pl.BlockSpec((M, K), lambda i: (0, 0)),  # full-extent blocks
                pl.BlockSpec((N, K), lambda i: (0, 0)),
            ],
            out_specs=pl.BlockSpec((M, N), lambda i: (0, 0)),
            compiler_params=pltpu.CompilerParams(
                dimension_semantics=("arbitrary",),
                vmem_limit_bytes=vmem_limit_bytes,
            ),
        )(x, weight)
        return out.reshape(orig_shape[:-1] + (N,))

    # ---------------- tiled path ------------------------------------------
    # Effective tiles: shrink toward the (lane/sublane-aligned) dim if the dim
    # is smaller than the requested tile; then zero-pad so tiles divide evenly.
    tm_e = min(tm, _round_up(M, 8))      # sublane axis of x / out
    tn_e = min(tn, _round_up(N, 128))    # lane axis of out, sublane of W
    tk_e = min(tk, _round_up(K, 128))    # lane axis of x and W

    Mp, Np, Kp = _round_up(M, tm_e), _round_up(N, tn_e), _round_up(K, tk_e)
    if (Mp, Kp) != (M, K):
        x = jnp.pad(x, ((0, Mp - M), (0, Kp - K)))           # zeros are inert
    if (Np, Kp) != (N, K):
        weight = jnp.pad(weight, ((0, Np - N), (0, Kp - K)))

    out = pl.pallas_call(
        functools.partial(_tiled_kernel, compute_dtype=matmul_dtype),
        out_shape=jax.ShapeDtypeStruct((Mp, Np), out_dtype),
        # M outermost -> W re-read once per M tile; K innermost -> output
        # block index constant across K -> accumulator stays resident.
        grid=(Mp // tm_e, Np // tn_e, Kp // tk_e),
        in_specs=[
            pl.BlockSpec((tm_e, tk_e), lambda i, j, k: (i, k)),   # x
            pl.BlockSpec((tn_e, tk_e), lambda i, j, k: (j, k)),   # W (n_out, n_in)
        ],
        out_specs=pl.BlockSpec((tm_e, tn_e), lambda i, j, k: (i, j)),
        scratch_shapes=[pltpu.VMEM((tm_e, tn_e), jnp.float32)],
        compiler_params=pltpu.CompilerParams(
            dimension_semantics=("parallel", "parallel", "arbitrary"),
            vmem_limit_bytes=vmem_limit_bytes,
        ),
    )(x, weight)

    if (Mp, Np) != (M, N):
        out = out[:M, :N]
    return out.reshape(orig_shape[:-1] + (N,))


def reference_forward(x, weight):
    return jnp.maximum(x, 0.0) @ weight.T.astype(jnp.float32)


# ----------------------------------------------------------------------------
# Demo / correctness checks
# ----------------------------------------------------------------------------
if __name__ == "__main__":
    key = jax.random.PRNGKey(0)
    k1, k2, k3, k4, k5, k6 = jax.random.split(key, 6)

    def make_inputs(kx, kw, batch, n_in, n_out):
        x = jax.random.normal(kx, (batch, n_in), dtype=jnp.float32)
        # nn.Linear default init ~ U(-1/sqrt(n_in), 1/sqrt(n_in)); bias=False.
        bound = 1.0 / jnp.sqrt(jnp.float32(n_in))
        w = jax.random.uniform(kw, (n_out, n_in), dtype=jnp.float32,
                               minval=-bound, maxval=bound)
        return x, w

    # 1) Small shape (module-scale demo) -> single-block fast path, f32.
    x_s, w_s = make_inputs(k1, k2, batch=8, n_in=32, n_out=128)
    out_s = jax.block_until_ready(linear_forward(x_s, w_s))
    ref_s = reference_forward(x_s, w_s)
    assert out_s.shape == (8, 128)
    assert jnp.allclose(out_s, ref_s, atol=1e-4, rtol=1e-4)

    # 2) Medium shape -> tiled path (grid (2,3,2)), f32 operands.
    x_m, w_m = make_inputs(k3, k4, batch=256, n_in=512, n_out=384)
    out_m = jax.block_until_ready(
        linear_forward(x_m, w_m, tm=128, tn=128, tk=256))
    ref_m = reference_forward(x_m, w_m)
    assert out_m.shape == (256, 384)
    assert jnp.allclose(out_m, ref_m, atol=1e-3, rtol=1e-3)

    # 3) Same medium shape with bf16 MXU operands (v6e/v7x fast mode),
    #    f32 accumulation; compared against the f32 reference loosely.
    out_b = jax.block_until_ready(
        linear_forward(x_m, w_m, tm=128, tn=128, tk=256,
                       matmul_dtype=jnp.bfloat16))
    assert jnp.allclose(out_b, ref_m, atol=5e-2, rtol=5e-2)

    # 4) Ragged dims -> exercises zero-padding + output slice in the wrapper.
    x_r, w_r = make_inputs(k5, k6, batch=200, n_in=300, n_out=250)
    out_r = jax.block_until_ready(
        linear_forward(x_r, w_r, tm=128, tn=128, tk=256))
    ref_r = reference_forward(x_r, w_r)
    assert out_r.shape == (200, 250)
    assert jnp.allclose(out_r, ref_r, atol=1e-3, rtol=1e-3)

    # 5) Leading batch dims, nn.Linear style: (2, 4, 32) @ (128, 32).T
    x_3d = jax.random.normal(k1, (2, 4, 32), dtype=jnp.float32)
    out_3d = jax.block_until_ready(linear_forward(x_3d, w_s))
    ref_3d = reference_forward(x_3d.reshape(-1, 32), w_s).reshape(2, 4, 128)
    assert out_3d.shape == (2, 4, 128)
    assert jnp.allclose(out_3d, ref_3d, atol=1e-4, rtol=1e-4)

    # TODO(synk): norm='bn'/'ln', bias=True and spectral_norm branches are
    # disabled in the default Linear config and are not implemented here.
    print("KERNEL_OK")
</pallas_src>

<mosaic_0001>
module attributes {stable_mosaic.version = 11 : i64} {
  func.func @_single_block_kernel(%arg0: i32, %arg1: memref<8x32xf32, #tpu.memory_space<vmem>>, %arg2: memref<128x32xf32, #tpu.memory_space<vmem>>, %arg3: memref<8x128xf32, #tpu.memory_space<vmem>>) attributes {dimension_semantics = [#tpu.dimension_semantics<arbitrary>], iteration_bounds = array<i64: 1>, scalar_prefetch = 0 : i64, scratch_operands = 0 : i64, tpu.core_type = #tpu.core_type<tc>, window_params = [{pipeline_mode = #tpu.pipeline_mode<synchronous>, transform_indices = @transform_0, window_bounds = array<i64: 8, 32>}, {pipeline_mode = #tpu.pipeline_mode<synchronous>, transform_indices = @transform_1, window_bounds = array<i64: 128, 32>}, {pipeline_mode = #tpu.pipeline_mode<synchronous>, transform_indices = @transform_2, window_bounds = array<i64: 8, 128>}]} {
    %c0 = arith.constant 0 : index
    %c0_0 = arith.constant 0 : index
    %0 = vector.load %arg1[%c0, %c0_0] : memref<8x32xf32, #tpu.memory_space<vmem>>, vector<8x32xf32>
    %cst = arith.constant 0.000000e+00 : f32
    %1 = vector.broadcast %cst : f32 to vector<8x32xf32>
    %2 = arith.maximumf %0, %1 : vector<8x32xf32>
    %c0_1 = arith.constant 0 : index
    %c0_2 = arith.constant 0 : index
    %3 = vector.load %arg2[%c0_1, %c0_2] : memref<128x32xf32, #tpu.memory_space<vmem>>, vector<128x32xf32>
    %cst_3 = arith.constant dense<0.000000e+00> : vector<8x128xf32>
    %4 = tpu.matmul %2, %3, %cst_3 {dimension_numbers = #tpu.dot_dimension_numbers<[1], [1], [0], [0], [0, 0, 1, 0], [], []>} : vector<8x32xf32>, vector<128x32xf32>, vector<8x128xf32> -> vector<8x128xf32>
    %c0_4 = arith.constant 0 : index
    %c0_5 = arith.constant 0 : index
    %5 = vector.load %arg3[%c0_4, %c0_5] : memref<8x128xf32, #tpu.memory_space<vmem>>, vector<8x128xf32>
    tpu.vector_store %arg3[%c0_4, %c0_5], %4 {strides = array<i32>} : memref<8x128xf32, #tpu.memory_space<vmem>>, vector<8x128xf32>,
    return
  }
  func.func @transform_0(%arg0: i32) -> (i32, i32) {
    %c0_i32 = arith.constant 0 : i32
    %c0_i32_0 = arith.constant 0 : i32
    %c0_i32_1 = arith.constant 0 : i32
    return %c0_i32, %c0_i32_0 : i32, i32
  }
  func.func @transform_1(%arg0: i32) -> (i32, i32) {
    %c0_i32 = arith.constant 0 : i32
    %c0_i32_0 = arith.constant 0 : i32
    %c0_i32_1 = arith.constant 0 : i32
    return %c0_i32, %c0_i32_0 : i32, i32
  }
  func.func @transform_2(%arg0: i32) -> (i32, i32) {
    %c0_i32 = arith.constant 0 : i32
    %c0_i32_0 = arith.constant 0 : i32
    %c0_i32_1 = arith.constant 0 : i32
    return %c0_i32, %c0_i32_0 : i32, i32
  }
}

</mosaic_0001>

<llo_original>
// kernel: tpu_custom_call.1
$region0: #{tpu_custom_call.1}
  #allocation0 [shape = 'u32[]', space=smem, size = 0x4, offset = 0x4, fixed_abs, tag = 'smem constant byte address 0x4 - core index']
  #allocation1 [shape = 'u32[72,128]{1,0:T(1,128)}', space=vmem, size = 0x9000, scoped, tag = 'internal scratch']
  %s0 = inlined_call_operand.vmem [shape: f32[8,32], index: 0, kind: input, shape index: {}]
  %s1 = inlined_call_operand.vmem [shape: f32[128,32], index: 1, kind: input, shape index: {}]
  %s2 = inlined_call_operand.hbm [shape: f32[8,128], index: 2, kind: output, shape index: {}]
  %s3 = sld [smem:[#allocation0]]
  $region18: #{tpu_custom_call.1} parent=0
    _
  %s5 = ssub.s32 1, %s3
  %s6 = scalar_select 0, %s5, %s3
  $region1: #{tpu_custom_call.1} parent=0
    #allocation2 [shape = 'u8[4096]{0}', space=vmem, size = 0x1000, scoped, tag = 'output window, operand 0, single buffered']
    #allocation3 [shape = 's32[1]{0}', space=sflag, size = 0x4, scoped, tag = 'scoped memory for tpu_custom_call.1']
    %7 = vsyncpa [#allocation3], 0
    // Predicated region
    $region2: #{tpu_custom_call.1} parent=1 // pred_check
      _
    $region3: #{tpu_custom_call.1} parent=1 // pred_check_branch
      %9 = sbr.rel (0) target = $region5
    $region4: #{tpu_custom_call.1} parent=1 // pred_region
      _
    $region5: #{tpu_custom_call.1} parent=1 // pred_fallthru
      _
    // Predicated region
    $region6: #{tpu_custom_call.1} parent=1 // pred_check
      _
    $region7: #{tpu_custom_call.1} parent=1 // pred_check_branch
      %11 = sbr.rel (0) target = $region9
    $region8: #{tpu_custom_call.1} parent=1 // pred_region
      _
    $region9: #{tpu_custom_call.1} parent=1 // pred_fallthru
      _
    %v12 = vld [vmem:[%s0] sm:$0xff]
    %v13 = vmax.f32 %v12, 0.0
    %v14 = vld [vmem:[%s1] sm:$0xff]
    %v15 = vld [vmem:[%s1 + $0x8] sm:$0xff]
    %v16 = vld [vmem:[%s1 + $0x10] sm:$0xff]
    %v17 = vld [vmem:[%s1 + $0x18] sm:$0xff]
    %v18 = vld [vmem:[%s1 + $0x20] sm:$0xff]
    %v19 = vld [vmem:[%s1 + $0x28] sm:$0xff]
    %v20 = vld [vmem:[%s1 + $0x30] sm:$0xff]
    %v21 = vld [vmem:[%s1 + $0x38] sm:$0xff]
    %v22 = vld [vmem:[%s1 + $0x40] sm:$0xff]
    %v23 = vld [vmem:[%s1 + $0x48] sm:$0xff]
    %v24 = vld [vmem:[%s1 + $0x50] sm:$0xff]
    %v25 = vld [vmem:[%s1 + $0x58] sm:$0xff]
    %v26 = vld [vmem:[%s1 + $0x60] sm:$0xff]
    %v27 = vld [vmem:[%s1 + $0x68] sm:$0xff]
    %v28 = vld [vmem:[%s1 + $0x70] sm:$0xff]
    %v29 = vld [vmem:[%s1 + $0x78] sm:$0xff]
    %vm30 = vcmask 261120
    %v32 = vsel %vm30, %v13, 0
    %v35 = vsel %vm30, %v14, 0
    %v38 = vsel %vm30, %v15, 0
    %v41 = vsel %vm30, %v16, 0
    %v44 = vsel %vm30, %v17, 0
    %v47 = vsel %vm30, %v18, 0
    %v50 = vsel %vm30, %v19, 0
    %v53 = vsel %vm30, %v20, 0
    %v56 = vsel %vm30, %v21, 0
    %v59 = vsel %vm30, %v22, 0
    %v62 = vsel %vm30, %v23, 0
    %v65 = vsel %vm30, %v24, 0
    %v68 = vsel %vm30, %v25, 0
    %v71 = vsel %vm30, %v26, 0
    %v74 = vsel %vm30, %v27, 0
    %v77 = vsel %vm30, %v28, 0
    %v80 = vsel %vm30, %v29, 0
    %82 = vmatpush.xpose.msra.mxu0 %v80
    %83 = vmatpush.xpose.msra.mxu0 %v77
    %84 = vmatpush.xpose.msra.mxu0 %v74
    %85 = vmatpush.xpose.msra.mxu0 %v71
    %86 = vmatpush.xpose.msra.mxu0 %v68
    %87 = vmatpush.xpose.msra.mxu0 %v65
    %88 = vmatpush.xpose.msra.mxu0 %v62
    %89 = vmatpush.xpose.msra.mxu0 %v59
    %90 = vmatpush.xpose.msra.mxu0 %v56
    %91 = vmatpush.xpose.msra.mxu0 %v53
    %92 = vmatpush.xpose.msra.mxu0 %v50
    %93 = vmatpush.xpose.msra.mxu0 %v47
    %94 = vmatpush.xpose.msra.mxu0 %v44
    %95 = vmatpush.xpose.msra.mxu0 %v41
    %96 = vmatpush.xpose.msra.mxu0 %v38
    %97 = vmatpush.xpose.msra.mxu0 %v35
    %98 = vmatmul.f32.gmra.mxu0 %v32
    %v99 = vpop.f32.mrf.mxu0
    %v100 = vadd.f32 0.0, %v99
    %101 = vdwg.mxu0
    %102 = vst [vmem:[#allocation2] sm:$0xff] %v100
    // Predicated region
    $region10: #{tpu_custom_call.1} parent=1 // pred_check
      _
    $region11: #{tpu_custom_call.1} parent=1 // pred_check_branch
      %104 = sbr.rel (0) target = $region13
    $region12: #{tpu_custom_call.1} parent=1 // pred_region
      %106 = vsyncadd [#allocation3], 0
      %s108 = sshll.u32 [#allocation2], 4
      %s109 = int_to_ptr.vmem [resolvable:$true] %s108
      %s110 = sshll.u32 %s2, 4
      %s111 = int_to_ptr.hbm [resolvable:$true] %s110
      %113 = dma.vmem_to_hbm [thread:$0]  %s109, 128, %s111, [#allocation3]
    $region13: #{tpu_custom_call.1} parent=1 // pred_fallthru
      _
    // Predicated region
    $region14: #{tpu_custom_call.1} parent=1 // pred_check
      _
    $region15: #{tpu_custom_call.1} parent=1 // pred_check_branch
      %115 = sbr.rel (0) target = $region17
    $region16: #{tpu_custom_call.1} parent=1 // pred_region
      %117 = dma.done [#allocation3], 128
    $region17: #{tpu_custom_call.1} parent=1 // pred_fallthru
      _
    %118 = vsyncpa [#allocation3], 1

</llo_original>
